<compile_context>
chip_gen: v5e
topology: v5e:2x2
jax: 0.10.0
libtpu: 0.0.40
codegen_flags: <defaults>
</compile_context>

<pallas_src>
import functools

import numpy as np

import jax
import jax.numpy as jnp
from jax import lax
from jax.experimental import pallas as pl
from jax.experimental.pallas import tpu as pltpu


_DN_LAST = (((1,), (1,)), ((), ()))     # dot_general: contract last dim vs last dim


def _l2_normalize(x, eps=1e-12):
    ss = jnp.sum(x * x, axis=-1, keepdims=True)
    return x / jnp.maximum(jnp.sqrt(ss), eps)


def _prep_kernel(z_ref, p_ref, zn_ref, rpc_ref, rpr_ref):
    """Normalize z / prototypes, cast to bf16 MXU operands, compute Rpoint."""
    zn = _l2_normalize(z_ref[...].astype(jnp.float32))          # (N, D) f32
    pn = _l2_normalize(p_ref[...].astype(jnp.float32))          # (P, D) f32
    zn_bf = zn.astype(jnp.bfloat16)
    pn_bf = pn.astype(jnp.bfloat16)
    zn_ref[...] = zn_bf
    # Rpoint in both orientations so the threshold compare below never needs a
    # transpose/relayout (bf16 operands, f32 accumulation on the MXU).
    rpc_ref[...] = jnp.max(
        lax.dot_general(zn_bf, pn_bf, _DN_LAST, preferred_element_type=jnp.float32),
        axis=1, keepdims=True)                                  # (N, 1)
    rpr_ref[...] = jnp.max(
        lax.dot_general(pn_bf, zn_bf, _DN_LAST, preferred_element_type=jnp.float32),
        axis=0, keepdims=True)                                  # (1, N)


def _tile_kernel(zn_ref, rpc_ref, rpr_ref, nd_ref, nb_ref, num_ref, den_ref, *,
                 tile_rows, inv_temp):
    """One fused tile of R mini-iter blocks (tile_rows = R*split rows)."""
    t = pl.program_id(0)
    row0 = pl.multiple_of(t * tile_rows, tile_rows)
    zb = zn_ref[pl.ds(row0, tile_rows), :]                      # (TM, D) bf16
    # Cosine similarities of this tile against the whole batch: bf16 operands,
    # f32 accumulation on the MXU, no materialized transpose.
    c = lax.dot_general(zb, zn_ref[...], _DN_LAST,
                        preferred_element_type=jnp.float32)     # (TM, N)

    # (c > Rpoint_row) | (c > Rpoint_col)  ==  c > min(Rpoint_row, Rpoint_col)
    thr = jnp.minimum(rpc_ref[...], rpr_ref[...])               # (TM,1)x(1,N)->(TM,N)
    not_diag = nd_ref[...] != 0                                 # j != (i % split)
    mask_pos = jnp.logical_and(c > thr, not_diag)
    neg_neglect = jnp.logical_or(mask_pos, nb_ref[...] != 0)    # nb = base & not_diag

    logits = c * inv_temp
    # Row-max subtraction dropped: inputs are L2-normalized, so |logits| <= 1/T
    # (~14.3) - exp-safe in f32 and mathematically identical to the reference.
    e = jnp.where(neg_neglect, jnp.exp(logits), 0.0)
    log_prob = logits - jnp.log(jnp.sum(e, axis=1, keepdims=True))
    # Rows with no positives contribute exactly zero (matches the reference's
    # nonzero_idx row drop); the where() guard keeps +/-inf log_prob out.
    num_ref[...] = jnp.sum(jnp.where(mask_pos, log_prob, 0.0), axis=1, keepdims=True)
    den_ref[...] = jnp.sum(jnp.where(mask_pos, 1.0, 0.0), axis=1, keepdims=True)


def _pick_blocks_per_tile(mini_iters, split, target_rows):
    """Largest R dividing mini_iters with R*split <= target_rows and a
    layout-legal tile height (multiple of 8, or the whole batch)."""
    n = mini_iters * split
    for r in range(min(mini_iters, max(1, target_rows // split)), 0, -1):
        tm = r * split
        if mini_iters % r == 0 and (tm % 8 == 0 or tm == n):
            return r
    return mini_iters            # whole batch as a single tile (always legal)


def supcon_loss(modeloutput_z, prototypes, mask_neglect_base, *,
                temperature=0.07, base_temperature=0.07, loss_version=1,
                reweighting=1, weight_loss=1.0, target_tile_rows=256):
    """modeloutput_z: (B, S, D); prototypes: (P, D); mask_neglect_base: (S, B*S).

    The Bernoulli(rho) neglect mask the PyTorch module draws internally is
    taken as an explicit input so kernel and reference share one realization.
    loss_version 1 and 2 are numerically identical in the forward pass.
    """
    del loss_version
    b0, split, d = modeloutput_z.shape
    n = b0 * split
    p = prototypes.shape[0]
    mini_iters = b0
    z2d = modeloutput_z.reshape(n, d).astype(jnp.float32)
    d_pad = max(d, 128)          # D < 128 is lane-padded; budget for it explicitly

    # ---- prep: normalize, cast to bf16, Rpoint (runs once) -------------------
    prep_vmem = int(min(60 * 1024 * 1024,
                        max(4 * 1024 * 1024,
                            4 * ((n + p) * d_pad * 4 + n * d_pad * 2))))
    zn_bf, rp_col, rp_row = pl.pallas_call(
        _prep_kernel,
        out_shape=(jax.ShapeDtypeStruct((n, d), jnp.bfloat16),
                   jax.ShapeDtypeStruct((n, 1), jnp.float32),
                   jax.ShapeDtypeStruct((1, n), jnp.float32)),
        grid=(1,),
        in_specs=[pl.BlockSpec((n, d), lambda i: (0, 0)),
                  pl.BlockSpec((p, d), lambda i: (0, 0))],
        out_specs=(pl.BlockSpec((n, d), lambda i: (0, 0)),
                   pl.BlockSpec((n, 1), lambda i: (0, 0)),
                   pl.BlockSpec((1, n), lambda i: (0, 0))),
        compiler_params=pltpu.CompilerParams(
            dimension_semantics=("arbitrary",),
            vmem_limit_bytes=prep_vmem),
    )(z2d, prototypes.astype(jnp.float32))

    # ---- fused-tile main kernel ----------------------------------------------
    # TODO(synk): target_tile_rows=256 suits the v6e/v7x 256-high MXU; use 128
    # on v5e (128x128 MXU, 16 MiB default scoped VMEM).
    r_blocks = _pick_blocks_per_tile(mini_iters, split, target_tile_rows)
    tm = r_blocks * split
    num_tiles = n // tm

    # Per-tile-constant masks (identical for every tile): diagonal-exclusion
    # pattern and the precombined (random-neglect & not-diag) mask, as int8, so
    # the kernel never rebuilds iotas / re-ANDs the base mask per step.
    col_ids = jnp.arange(n, dtype=jnp.int32)[None, :]
    srow = (jnp.arange(tm, dtype=jnp.int32) % split)[:, None]
    not_diag = col_ids != srow                                   # (TM, N) bool
    base_b = jnp.tile(jnp.asarray(mask_neglect_base) != 0, (r_blocks, 1))
    nd_i8 = not_diag.astype(jnp.int8)
    nb_i8 = jnp.logical_and(base_b, not_diag).astype(jnp.int8)

    n_pad = max(n, 128)
    vmem_est = (n * d_pad * 2          # resident bf16 embeddings
                + 2 * tm * n_pad       # int8 masks
                + 8 * tm * n_pad * 4   # f32 per-tile temporaries (generous)
                + 4 * n_pad            # Rpoint row
                + 12 * tm * 4)         # Rpoint col + outputs (double-buffered)
    main_vmem = int(min(60 * 1024 * 1024, max(4 * 1024 * 1024, 2 * vmem_est)))

    cost = pl.CostEstimate(
        flops=2 * n * n * d,
        transcendentals=n * n + n,
        bytes_accessed=n * d * 2 + 2 * tm * n + 16 * n)

    kernel = functools.partial(_tile_kernel, tile_rows=tm,
                               inv_temp=1.0 / float(temperature))

    def _call(buffered):
        # Buffered(1): constant-index resident inputs need no double buffer.
        res = dict(pipeline_mode=pl.Buffered(1)) if buffered else {}
        in_specs = [
            pl.BlockSpec((n, d), lambda t: (0, 0), **res),       # zn (resident)
            pl.BlockSpec((tm, 1), lambda t: (t, 0)),             # Rpoint col (per tile)
            pl.BlockSpec((1, n), lambda t: (0, 0), **res),       # Rpoint row (resident)
            pl.BlockSpec((tm, n), lambda t: (0, 0), **res),      # not-diag int8
            pl.BlockSpec((tm, n), lambda t: (0, 0), **res),      # neglect-base int8
        ]
        return pl.pallas_call(
            kernel,
            out_shape=(jax.ShapeDtypeStruct((n, 1), jnp.float32),
                       jax.ShapeDtypeStruct((n, 1), jnp.float32)),
            grid=(num_tiles,),
            in_specs=in_specs,
            out_specs=(pl.BlockSpec((tm, 1), lambda t: (t, 0)),
                       pl.BlockSpec((tm, 1), lambda t: (t, 0))),
            compiler_params=pltpu.CompilerParams(
                dimension_semantics=("parallel",),   # independent tiles -> 2nd TC on v7x
                vmem_limit_bytes=main_vmem),
            cost_estimate=cost,
        )(zn_bf, rp_col, rp_row, nd_i8, nb_i8)

    try:
        num_r, den_r = _call(True)
    except Exception:
        # Fallback only covers jax builds where BlockSpec.pipeline_mode /
        # Buffered(1) is not supported on the TPU pallas_call path.
        num_r, den_r = _call(False)

    # ---- final O(mini_iters) combination (plain JAX, per the review) ---------
    num_b = num_r.reshape(mini_iters, split)
    den_b = den_r.reshape(mini_iters, split)
    scale = float(temperature) / float(base_temperature)
    if reweighting == 1:
        # The reference's re-weighted mean reduces exactly to sum(num)/sum(den)
        # per mini-iter block.
        ns = jnp.sum(num_b, axis=1)
        ds = jnp.sum(den_b, axis=1)
        block_loss = -scale * jnp.where(ds > 0, ns / jnp.where(ds > 0, ds, 1.0), 0.0)
    else:
        valid = den_b > 0
        mlpp = jnp.where(valid, num_b / jnp.where(valid, den_b, 1.0), 0.0)
        cnt = jnp.sum(valid.astype(jnp.float32), axis=1)
        block_loss = -scale * jnp.where(cnt > 0,
                                        jnp.sum(mlpp, axis=1) / jnp.maximum(cnt, 1.0),
                                        0.0)
    # Blocks with zero positives contribute 0 (the PyTorch reference would NaN
    # on the empty mean there).
    return jnp.sum(block_loss) / mini_iters * float(weight_loss)


# ------------------------------ reference --------------------------------------
def _round_bf16(x):
    """f32 -> bf16 -> f32 round-trip (mirrors the kernel's MXU-operand cast)."""
    return np.asarray(
        jnp.asarray(np.asarray(x, np.float32)).astype(jnp.bfloat16).astype(jnp.float32))


def _reference_numpy(modeloutput_z, prototypes, neg_base, *, temperature=0.07,
                     base_temperature=0.07, reweighting=1, weight_loss=1.0,
                     emulate_bf16_operands=True):
    """NumPy reference mirroring the PyTorch code line by line.

    With emulate_bf16_operands=True the normalized embeddings/prototypes are
    rounded to bf16 before the matmuls (f32 accumulation), matching the
    kernel's MXU-operand precision so the comparison tolerance can stay tight.
    """
    z = np.asarray(modeloutput_z, dtype=np.float32)
    protos = np.asarray(prototypes, dtype=np.float32)
    base = np.asarray(neg_base) > 0.0

    protos = protos / np.maximum(np.linalg.norm(protos, axis=-1, keepdims=True), 1e-12)
    z = z / np.maximum(np.linalg.norm(z, axis=-1, keepdims=True), 1e-12)
    split = z.shape[1]
    z = z.reshape(-1, z.shape[-1])
    if emulate_bf16_operands:
        z = _round_bf16(z)
        protos = _round_bf16(protos)
    n = z.shape[0]
    mini_iters = n // split

    negative_mask_one = np.ones((split, n), dtype=np.float32)
    negative_mask_one[np.arange(split), np.arange(split)] = 0.0

    rpoint = (z @ protos.T).max(axis=1)                     # (N,)
    loss = 0.0
    with np.errstate(divide="ignore", invalid="ignore"):
        for mi in range(mini_iters):
            zb = z[mi * split:(mi + 1) * split]
            c = zb @ z.T                                    # (S, N)
            m_t = rpoint[None, :] < c
            m_r = rpoint[mi * split:(mi + 1) * split, None] < c
            mask_one = np.logical_or(m_r, m_t)
            neglect = np.logical_or(mask_one, base)
            neg_neglect = negative_mask_one * neglect
            mask_pos = mask_one * negative_mask_one
            logits = c / temperature
            logits = logits - logits.max(axis=1, keepdims=True)
            exp_l = np.exp(logits) * neg_neglect
            log_prob = logits - np.log(exp_l.sum(axis=1, keepdims=True))
            idx = np.where(mask_pos.sum(axis=1) != 0.0)[0]
            m = mask_pos[idx]
            lp = log_prob[idx]
            if reweighting == 1:
                pnm = m.sum(axis=1)
                pnm = pnm / pnm.sum()
                pnm = pnm / pnm.mean()
            else:
                pnm = 1.0
            mlpp = (m * lp).sum(axis=1) / m.sum(axis=1)
            loss = loss - np.mean(temperature / base_temperature * mlpp * pnm)
    return loss / mini_iters * weight_loss


if __name__ == "__main__":
    key = jax.random.PRNGKey(0)
    kz, kp, km = jax.random.split(key, 3)

    B0, S, D, P = 2, 8, 32, 4       # batch (mini_iters), spatial (split), hidden, prototypes
    rho = 0.02
    z = jax.random.normal(kz, (B0, S, D), dtype=jnp.float32)
    protos = jax.random.normal(kp, (P, D), dtype=jnp.float32)
    # The PyTorch module draws this Bernoulli(rho) mask with uniform_() < rho;
    # it is generated host-side here so kernel and reference share one draw.
    neg_base = (jax.random.uniform(km, (S, B0 * S)) < rho).astype(jnp.float32)

    loss = supcon_loss(z, protos, neg_base, temperature=0.07,
                       base_temperature=0.07, loss_version=1, reweighting=1,
                       weight_loss=1.0)
    loss = jax.block_until_ready(loss)

    ref = _reference_numpy(np.asarray(z), np.asarray(protos), np.asarray(neg_base),
                           temperature=0.07, base_temperature=0.07,
                           reweighting=1, weight_loss=1.0)

    assert bool(jnp.isfinite(loss)), loss
    assert abs(float(loss) - float(ref)) <= 1e-3 + 1e-3 * abs(float(ref)), (
        float(loss), float(ref))

    print("KERNEL_OK")
</pallas_src>

<mosaic_0001>
module attributes {stable_mosaic.version = 11 : i64} {
  func.func @_prep_kernel(%arg0: i32, %arg1: memref<16x32xf32, #tpu.memory_space<vmem>>, %arg2: memref<4x32xf32, #tpu.memory_space<vmem>>, %arg3: memref<16x32xbf16, #tpu.memory_space<vmem>>, %arg4: memref<16x1xf32, #tpu.memory_space<vmem>>, %arg5: memref<1x16xf32, #tpu.memory_space<vmem>>) attributes {dimension_semantics = [#tpu.dimension_semantics<arbitrary>], iteration_bounds = array<i64: 1>, scalar_prefetch = 0 : i64, scratch_operands = 0 : i64, tpu.core_type = #tpu.core_type<tc>, window_params = [{pipeline_mode = #tpu.pipeline_mode<synchronous>, transform_indices = @transform_0, window_bounds = array<i64: 16, 32>}, {pipeline_mode = #tpu.pipeline_mode<synchronous>, transform_indices = @transform_1, window_bounds = array<i64: 4, 32>}, {pipeline_mode = #tpu.pipeline_mode<synchronous>, transform_indices = @transform_2, window_bounds = array<i64: 16, 32>}, {pipeline_mode = #tpu.pipeline_mode<synchronous>, transform_indices = @transform_3, window_bounds = array<i64: 16, 1>}, {pipeline_mode = #tpu.pipeline_mode<synchronous>, transform_indices = @transform_4, window_bounds = array<i64: 1, 16>}]} {
    %c0 = arith.constant 0 : index
    %c0_0 = arith.constant 0 : index
    %0 = vector.load %arg1[%c0, %c0_0] : memref<16x32xf32, #tpu.memory_space<vmem>>, vector<16x32xf32>
    %1 = arith.mulf %0, %0 : vector<16x32xf32>
    %cst = arith.constant dense<0.000000e+00> : vector<16xf32>
    %2 = vector.multi_reduction <add>, %1, %cst [1] : vector<16x32xf32> to vector<16xf32>
    %3 = vector.shape_cast %2 : vector<16xf32> to vector<16x1xf32>
    %4 = math.sqrt %3 : vector<16x1xf32>
    %cst_1 = arith.constant 9.99999996E-13 : f32
    %5 = vector.broadcast %cst_1 : f32 to vector<16x1xf32>
    %6 = arith.maximumf %4, %5 : vector<16x1xf32>
    %7 = vector.broadcast %6 : vector<16x1xf32> to vector<16x32xf32>
    %8 = arith.divf %0, %7 : vector<16x32xf32>
    %c0_2 = arith.constant 0 : index
    %c0_3 = arith.constant 0 : index
    %9 = vector.load %arg2[%c0_2, %c0_3] : memref<4x32xf32, #tpu.memory_space<vmem>>, vector<4x32xf32>
    %10 = arith.mulf %9, %9 : vector<4x32xf32>
    %cst_4 = arith.constant dense<0.000000e+00> : vector<4xf32>
    %11 = vector.multi_reduction <add>, %10, %cst_4 [1] : vector<4x32xf32> to vector<4xf32>
    %12 = vector.shape_cast %11 : vector<4xf32> to vector<4x1xf32>
    %13 = math.sqrt %12 : vector<4x1xf32>
    %cst_5 = arith.constant 9.99999996E-13 : f32
    %14 = vector.broadcast %cst_5 : f32 to vector<4x1xf32>
    %15 = arith.maximumf %13, %14 : vector<4x1xf32>
    %16 = vector.broadcast %15 : vector<4x1xf32> to vector<4x32xf32>
    %17 = arith.divf %9, %16 : vector<4x32xf32>
    %18 = arith.truncf %8 : vector<16x32xf32> to vector<16x32xbf16>
    %19 = arith.truncf %17 : vector<4x32xf32> to vector<4x32xbf16>
    %c0_6 = arith.constant 0 : index
    %c0_7 = arith.constant 0 : index
    %20 = vector.load %arg3[%c0_6, %c0_7] : memref<16x32xbf16, #tpu.memory_space<vmem>>, vector<16x32xbf16>
    tpu.vector_store %arg3[%c0_6, %c0_7], %18 {strides = array<i32>} : memref<16x32xbf16, #tpu.memory_space<vmem>>, vector<16x32xbf16>,
    %cst_8 = arith.constant dense<0.000000e+00> : vector<16x4xf32>
    %21 = tpu.matmul %18, %19, %cst_8 {dimension_numbers = #tpu.dot_dimension_numbers<[1], [1], [0], [0], [0, 0, 1, 0], [], []>} : vector<16x32xbf16>, vector<4x32xbf16>, vector<16x4xf32> -> vector<16x4xf32>
    %cst_9 = arith.constant dense<0xFF800000> : vector<16xf32>
    %22 = vector.multi_reduction <maximumf>, %21, %cst_9 [1] : vector<16x4xf32> to vector<16xf32>
    %23 = vector.shape_cast %22 : vector<16xf32> to vector<16x1xf32>
    %c0_10 = arith.constant 0 : index
    %c0_11 = arith.constant 0 : index
    %24 = vector.load %arg4[%c0_10, %c0_11] : memref<16x1xf32, #tpu.memory_space<vmem>>, vector<16x1xf32>
    tpu.vector_store %arg4[%c0_10, %c0_11], %23 {strides = array<i32>} : memref<16x1xf32, #tpu.memory_space<vmem>>, vector<16x1xf32>,
    %cst_12 = arith.constant dense<0.000000e+00> : vector<4x16xf32>
    %25 = tpu.matmul %19, %18, %cst_12 {dimension_numbers = #tpu.dot_dimension_numbers<[1], [1], [0], [0], [0, 0, 1, 0], [], []>} : vector<4x32xbf16>, vector<16x32xbf16>, vector<4x16xf32> -> vector<4x16xf32>
    %cst_13 = arith.constant dense<0xFF800000> : vector<16xf32>
    %26 = vector.multi_reduction <maximumf>, %25, %cst_13 [0] : vector<4x16xf32> to vector<16xf32>
    %27 = vector.shape_cast %26 : vector<16xf32> to vector<1x16xf32>
    %c0_14 = arith.constant 0 : index
    %c0_15 = arith.constant 0 : index
    %28 = vector.load %arg5[%c0_14, %c0_15] : memref<1x16xf32, #tpu.memory_space<vmem>>, vector<1x16xf32>
    tpu.vector_store %arg5[%c0_14, %c0_15], %27 {strides = array<i32>} : memref<1x16xf32, #tpu.memory_space<vmem>>, vector<1x16xf32>,
    return
  }
  func.func @transform_0(%arg0: i32) -> (i32, i32) {
    %c0_i32 = arith.constant 0 : i32
    %c0_i32_0 = arith.constant 0 : i32
    %c0_i32_1 = arith.constant 0 : i32
    return %c0_i32, %c0_i32_0 : i32, i32
  }
  func.func @transform_1(%arg0: i32) -> (i32, i32) {
    %c0_i32 = arith.constant 0 : i32
    %c0_i32_0 = arith.constant 0 : i32
    %c0_i32_1 = arith.constant 0 : i32
    return %c0_i32, %c0_i32_0 : i32, i32
  }
  func.func @transform_2(%arg0: i32) -> (i32, i32) {
    %c0_i32 = arith.constant 0 : i32
    %c0_i32_0 = arith.constant 0 : i32
    %c0_i32_1 = arith.constant 0 : i32
    return %c0_i32, %c0_i32_0 : i32, i32
  }
  func.func @transform_3(%arg0: i32) -> (i32, i32) {
    %c0_i32 = arith.constant 0 : i32
    %c0_i32_0 = arith.constant 0 : i32
    %c0_i32_1 = arith.constant 0 : i32
    return %c0_i32, %c0_i32_0 : i32, i32
  }
  func.func @transform_4(%arg0: i32) -> (i32, i32) {
    %c0_i32 = arith.constant 0 : i32
    %c0_i32_0 = arith.constant 0 : i32
    %c0_i32_1 = arith.constant 0 : i32
    return %c0_i32, %c0_i32_0 : i32, i32
  }
}

</mosaic_0001>

<llo_original>
// kernel: tpu_custom_call.1
$region0: #{tpu_custom_call.1}
  #allocation0 [shape = 'u32[]', space=smem, size = 0x4, offset = 0x4, fixed_abs, tag = 'smem constant byte address 0x4 - core index']
  #allocation1 [shape = 'u32[72,128]{1,0:T(1,128)}', space=vmem, size = 0x9000, scoped, tag = 'internal scratch']
  %s0 = inlined_call_operand.hbm [shape: f32[16,32], index: 0, kind: input, shape index: {}]
  %s1 = inlined_call_operand.hbm [shape: f32[4,32], index: 1, kind: input, shape index: {}]
  %s2 = inlined_call_operand.hbm [shape: bf16[16,32], index: 2, kind: output, shape index: {0}]
  %s3 = inlined_call_operand.vmem [shape: f32[16,1], index: 3, kind: output, shape index: {1}]
  %s4 = inlined_call_operand.hbm [shape: f32[1,16], index: 4, kind: output, shape index: {2}]
  %5 = xla_tuple %s2, %s3, %s4
  %s6 = sld [smem:[#allocation0]]
  $region42: #{tpu_custom_call.1} parent=0
    _
  %s8 = ssub.s32 1, %s6
  %s9 = scalar_select 0, %s8, %s6
  $region1: #{tpu_custom_call.1} parent=0
    #allocation2 [shape = 'u8[8192]{0}', space=vmem, size = 0x2000, scoped, tag = 'input window, operand 0, single buffered']
    #allocation3 [shape = 's32[1]{0}', space=sflag, size = 0x4, scoped, tag = 'scoped memory for tpu_custom_call.1']
    #allocation4 [shape = 's32[1]{0}', space=sflag, size = 0x4, scoped, tag = 'scoped memory for tpu_custom_call.1']
    #allocation5 [shape = 'u8[2048]{0}', space=vmem, size = 0x800, scoped, tag = 'input window, operand 1, single buffered']
    #allocation6 [shape = 's32[1]{0}', space=sflag, size = 0x4, scoped, tag = 'scoped memory for tpu_custom_call.1']
    #allocation7 [shape = 'u8[4096]{0}', space=vmem, size = 0x1000, scoped, tag = 'output window, operand 0, single buffered']
    #allocation8 [shape = 'u8[512]{0}', space=vmem, size = 0x400, scoped, tag = 'output window, operand 2, single buffered']
    #allocation9 [shape = 's32[1]{0}', space=sflag, size = 0x4, scoped, tag = 'scoped memory for tpu_custom_call.1']
    %10 = vsyncpa [#allocation3], 0
    %11 = vsyncpa [#allocation6], 0
    %12 = vsyncpa [#allocation4], 0
    %13 = vsyncpa [#allocation9], 0
    // Predicated region
    $region2: #{tpu_custom_call.1} parent=1 // pred_check
      _
    $region3: #{tpu_custom_call.1} parent=1 // pred_check_branch
      %15 = sbr.rel (0) target = $region5
    $region4: #{tpu_custom_call.1} parent=1 // pred_region
      %17 = vsyncadd [#allocation3], 0
      %s18 = sshll.u32 %s0, 4
      %s19 = int_to_ptr.hbm [resolvable:$true] %s18
      %s20 = sshll.u32 [#allocation2], 4
      %s21 = int_to_ptr.vmem [resolvable:$true] %s20
      %26 = dma.hbm_to_vmem [thread:$0]  %s19, 256, %s21, [#allocation3], 128, 128, 8
    $region5: #{tpu_custom_call.1} parent=1 // pred_fallthru
      _
    // Predicated region
    $region6: #{tpu_custom_call.1} parent=1 // pred_check
      _
    $region7: #{tpu_custom_call.1} parent=1 // pred_check_branch
      %28 = sbr.rel (0) target = $region9
    $region8: #{tpu_custom_call.1} parent=1 // pred_region
      %30 = vsyncadd [#allocation6], 0
      %s32 = sshll.u32 %s1, 4
      %s33 = int_to_ptr.hbm [resolvable:$true] %s32
      %s34 = sshll.u32 [#allocation5], 4
      %s35 = int_to_ptr.vmem [resolvable:$true] %s34
      %37 = dma.hbm_to_vmem [thread:$0]  %s33, 64, %s35, [#allocation6]
    $region9: #{tpu_custom_call.1} parent=1 // pred_fallthru
      _
    // Predicated region
    $region10: #{tpu_custom_call.1} parent=1 // pred_check
      _
    $region11: #{tpu_custom_call.1} parent=1 // pred_check_branch
      %39 = sbr.rel (0) target = $region13
    $region12: #{tpu_custom_call.1} parent=1 // pred_region
      %41 = dma.done [#allocation3], 256
    $region13: #{tpu_custom_call.1} parent=1 // pred_fallthru
      _
    // Predicated region
    $region14: #{tpu_custom_call.1} parent=1 // pred_check
      _
    $region15: #{tpu_custom_call.1} parent=1 // pred_check_branch
      %43 = sbr.rel (0) target = $region17
    $region16: #{tpu_custom_call.1} parent=1 // pred_region
      %45 = dma.done [#allocation6], 64
    $region17: #{tpu_custom_call.1} parent=1 // pred_fallthru
      _
    %v47 = vld [vmem:[#allocation2] sm:$0xff]
    %v48 = vld [vmem:[#allocation2 + $0x8] sm:$0xff]
    %v49 = vmul.f32 %v47, %v47
    %v50 = vmul.f32 %v48, %v48
    %vm51 = vcmask 261120
    %v52 = vsel %vm51, %v49, 0.0
    %53 = vadd.xlane.f32.xlu0 %v52
    %v54 = vpop.xlane.xlu0 %53
    %v55 = vsel %vm51, %v50, 0.0
    %56 = vadd.xlane.f32.xlu0 %v55
    %v57 = vpop.xlane.xlu0 %56
    %v58 = vrsqrt.pop %v54
    %v59 = vmul.f32 %v58, %v54
    %v60 = vmul.f32 %v59, %v58
    %v61 = vmul.f32 0.5, %v60
    %v62 = vsub.f32 1.5, %v61
    %v63 = vmul.f32 %v58, %v62
    %v64 = vmul.f32 %v54, %v63
    %vm65 = vcmp.eq.f32.partialorder %v54, inf
    %v66 = vsel %vm65, %v54, %v64
    %vm67 = vcmp.eq.f32.partialorder %v54, 0.0
    %v68 = vand.u32 %v54, 2147483648
    %v69 = vsel %vm67, %v68, %v66
    %v70 = vrsqrt.pop %v57
    %v71 = vmul.f32 %v70, %v57
    %v72 = vmul.f32 %v71, %v70
    %v73 = vmul.f32 0.5, %v72
    %v74 = vsub.f32 1.5, %v73
    %v75 = vmul.f32 %v70, %v74
    %v76 = vmul.f32 %v57, %v75
    %vm77 = vcmp.eq.f32.partialorder %v57, inf
    %v78 = vsel %vm77, %v57, %v76
    %vm79 = vcmp.eq.f32.partialorder %v57, 0.0
    %v80 = vand.u32 %v57, 2147483648
    %v81 = vsel %vm79, %v80, %v78
    %v82 = vmax.f32 %v69, 1e-12
    %v83 = vmax.f32 %v81, 1e-12
    %v84 = vrcp.pop %v82
    %v85 = vmul.f32 %v82, %v84
    %v86 = vsub.f32 1.0, %v85
    %v87 = vmul.f32 %v84, %v86
    %v88 = vadd.f32 %v84, %v87
    %vm89 = vweird.f32 %v82
    %vm90 = vweird.f32 %v84
    %vm91 = vmor %vm89, %vm90
    %v92 = vsel %vm91, %v84, %v88
    %v93 = vand.u32 2147483647, %v82
    %vm94 = vcmp.eq.f32.partialorder %v93, 8.507059e+37
    %v95 = vand.u32 %v82, 2147483648
    %v96 = vor.u32 1.1754944e-38, %v95
    %v97 = vsel %vm94, %v96, %v92
    %v98 = vmul.f32 %v47, %v97
    %v99 = vrcp.pop %v83
    %v100 = vmul.f32 %v83, %v99
    %v101 = vsub.f32 1.0, %v100
    %v102 = vmul.f32 %v99, %v101
    %v103 = vadd.f32 %v99, %v102
    %vm104 = vweird.f32 %v83
    %vm105 = vweird.f32 %v99
    %vm106 = vmor %vm104, %vm105
    %v107 = vsel %vm106, %v99, %v103
    %v108 = vand.u32 2147483647, %v83
    %vm109 = vcmp.eq.f32.partialorder %v108, 8.507059e+37
    %v110 = vand.u32 %v83, 2147483648
    %v111 = vor.u32 1.1754944e-38, %v110
    %v112 = vsel %vm109, %v111, %v107
    %v113 = vmul.f32 %v48, %v112
    %v114 = vld [vmem:[#allocation5] sm:$0xf]
    %v115 = vmul.f32 %v114, %v114
    %vm116 = vcmask 257024
    %v117 = vsel %vm116, %v115, 0.0
    %118 = vadd.xlane.f32.xlu0 %v117
    %v119 = vpop.xlane.xlu0 %118
    %v120 = vrsqrt.pop %v119
    %v121 = vmul.f32 %v120, %v119
    %v122 = vmul.f32 %v121, %v120
    %v123 = vmul.f32 0.5, %v122
    %v124 = vsub.f32 1.5, %v123
    %v125 = vmul.f32 %v120, %v124
    %v126 = vmul.f32 %v119, %v125
    %vm127 = vcmp.eq.f32.partialorder %v119, inf
    %v128 = vsel %vm127, %v119, %v126
    %vm129 = vcmp.eq.f32.partialorder %v119, 0.0
    %v130 = vand.u32 %v119, 2147483648
    %v131 = vsel %vm129, %v130, %v128
    %v132 = vmax.f32 %v131, 1e-12
    %v133 = vrcp.pop %v132
    %v134 = vmul.f32 %v132, %v133
    %v135 = vsub.f32 1.0, %v134
    %v136 = vmul.f32 %v133, %v135
    %v137 = vadd.f32 %v133, %v136
    %vm138 = vweird.f32 %v132
    %vm139 = vweird.f32 %v133
    %vm140 = vmor %vm138, %vm139
    %v141 = vsel %vm140, %v133, %v137
    %v142 = vand.u32 2147483647, %v132
    %vm143 = vcmp.eq.f32.partialorder %v142, 8.507059e+37
    %v144 = vand.u32 %v132, 2147483648
    %v145 = vor.u32 1.1754944e-38, %v144
    %v146 = vsel %vm143, %v145, %v141
    %v147 = vmul.f32 %v114, %v146
    %v148 = vpack.c.bf16 %v98, %v98
    %v149 = vpack.c.bf16 %v113, %v113
    %v150 = vpack.c.bf16 %v147, %v147
    %151 = vst.msk [vmem:[#allocation7] sm:$0xf] %vm116, %v148
    %152 = vst.msk [vmem:[#allocation7 + $0x4] sm:$0xf] %vm116, %v149
    %v155 = vunpack.c.l.b16 %v148
    %v156 = vunpack.c.l.b16 %v149
    %v157 = vpack.c.b16 %v156, %v155
    %v159 = vsel %vm51, %v157, 0
    %v162 = vsel %vm51, %v150, 0
    %164 = vmatpush.bf16.xpose.msra.mxu0 0
    %165 = vmatpush.bf16.xpose.msra.mxu0 0
    %166 = vmatpush.bf16.xpose.msra.mxu0 0
    %167 = vmatpush.bf16.xpose.msra.mxu0 0
    %168 = vmatpush.bf16.xpose.msra.mxu0 0
    %169 = vmatpush.bf16.xpose.msra.mxu0 0
    %170 = vmatpush.bf16.xpose.msra.mxu0 0
    %171 = vmatpush.bf16.xpose.msra.mxu0 %v162
    %172 = vmatmul.bf16.gmra.mxu0 %v159
    %v173 = vpop.f32.mrf.mxu0
    %v174 = vadd.f32 0.0, %v173
    %v175 = vpop.f32.mrf.mxu0
    %v176 = vadd.f32 0.0, %v175
    %177 = vdwg.mxu0
    %vm178 = vcmask 31744
    %v179 = vsel %vm178, %v174, -inf
    %180 = vmax.xlane.f32.xlu0 %v179
    %v181 = vpop.xlane.xlu0 %180
    %v182 = vsel %vm178, %v176, -inf
    %183 = vmax.xlane.f32.xlu0 %v182
    %v184 = vpop.xlane.xlu0 %183
    %vm185 = vcmask 7168
    %186 = vst.msk [vmem:[%s3] sm:$0xff] %vm185, %v181
    %187 = vst.msk [vmem:[%s3 + $0x8] sm:$0xff] %vm185, %v184
    %188 = vmatpush.bf16.xpose.msra.mxu0 0
    %189 = vmatpush.bf16.xpose.msra.mxu0 0
    %190 = vmatpush.bf16.xpose.msra.mxu0 0
    %191 = vmatpush.bf16.xpose.msra.mxu0 0
    %192 = vmatpush.bf16.xpose.msra.mxu0 0
    %193 = vmatpush.bf16.xpose.msra.mxu0 0
    %194 = vmatpush.bf16.xpose.msra.mxu0 0
    %195 = vmatpush.bf16.xpose.msra.mxu0 %v159
    %196 = vmatmul.bf16.gmra.mxu0 %v162
    %v197 = vpop.f32.mrf.mxu0
    %v198 = vadd.f32 0.0, %v197
    %v199 = vpop.f32.mrf.mxu0
    %200 = vdwg.mxu0
    %vm201 = vcmask 125952
    %v202 = vsel %vm201, %v198, -inf
    %v203 = vrot.slane %v202, 4
    %v204 = vmax.f32 %v202, %v203
    %v205 = vrot.slane %v204, 2
    %v206 = vmax.f32 %v204, %v205
    %v207 = vrot.slane %v206, 1
    %v208 = vmax.f32 %v206, %v207
    %vm209 = vcmask 122880
    %210 = vst.msk [vmem:[#allocation8] sm:$0x1] %vm209, %v208
    // Predicated region
    $region18: #{tpu_custom_call.1} parent=1 // pred_check
      _
    $region19: #{tpu_custom_call.1} parent=1 // pred_check_branch
      %212 = sbr.rel (0) target = $region21
    $region20: #{tpu_custom_call.1} parent=1 // pred_region
      %214 = vsyncadd [#allocation4], 0
      %s215 = sshll.u32 [#allocation7], 4
      %s216 = int_to_ptr.vmem [resolvable:$true] %s215
      %s217 = sshll.u32 %s2, 4
      %s218 = int_to_ptr.hbm [resolvable:$true] %s217
      %223 = dma.vmem_to_hbm [thread:$0]  %s216, 128, %s218, [#allocation4], 64, 64, 4
    $region21: #{tpu_custom_call.1} parent=1 // pred_fallthru
      _
    // Predicated region
    $region22: #{tpu_custom_call.1} parent=1 // pred_check
      _
    $region23: #{tpu_custom_call.1} parent=1 // pred_check_branch
      %225 = sbr.rel (0) target = $region25
    $region24: #{tpu_custom_call.1} parent=1 // pred_region
      _
    $region25: #{tpu_custom_call.1} parent=1 // pred_fallthru
      _
    // Predicated region
    $region26: #{tpu_custom_call.1} parent=1 // pred_check
      _
    $region27: #{tpu_custom_call.1} parent=1 // pred_check_branch
      %227 = sbr.rel (0) target = $region29
    $region28: #{tpu_custom_call.1} parent=1 // pred_region
      %229 = vsyncadd [#allocation9], 0
      %s231 = sshll.u32 [#allocation8], 4
      %s232 = int_to_ptr.vmem [resolvable:$true] %s231
      %s233 = sshll.u32 %s4, 4
      %s234 = int_to_ptr.hbm [resolvable:$true] %s233
      %236 = dma.vmem_to_hbm [thread:$0]  %s232, 16, %s234, [#allocation9]
    $region29: #{tpu_custom_call.1} parent=1 // pred_fallthru
      _
    // Predicated region
    $region30: #{tpu_custom_call.1} parent=1 // pred_check
      _
    $region31: #{tpu_custom_call.1} parent=1 // pred_check_branch
      %238 = sbr.rel (0) target = $region33
    $region32: #{tpu_custom_call.1} parent=1 // pred_region
      %240 = dma.done [#allocation4], 128
    $region33: #{tpu_custom_call.1} parent=1 // pred_fallthru
      _
    // Predicated region
    $region34: #{tpu_custom_call.1} parent=1 // pred_check
      _
    $region35: #{tpu_custom_call.1} parent=1 // pred_check_branch
      %242 = sbr.rel (0) target = $region37
    $region36: #{tpu_custom_call.1} parent=1 // pred_region
      _
    $region37: #{tpu_custom_call.1} parent=1 // pred_fallthru
      _
    // Predicated region
    $region38: #{tpu_custom_call.1} parent=1 // pred_check
      _
    $region39: #{tpu_custom_call.1} parent=1 // pred_check_branch
      %244 = sbr.rel (0) target = $region41
    $region40: #{tpu_custom_call.1} parent=1 // pred_region
      %246 = dma.done [#allocation9], 16
    $region41: #{tpu_custom_call.1} parent=1 // pred_fallthru
      _
    %247 = vsyncpa [#allocation3], 1
    %248 = vsyncpa [#allocation6], 1
    %249 = vsyncpa [#allocation4], 1
    %250 = vsyncpa [#allocation9], 1

</llo_original>
